<compile_context>
chip_gen: v6e
topology: v6e:2x2x1
jax: 0.10.0
libtpu: 0.0.40
codegen_flags: <defaults>
</compile_context>

<pallas_src>
import jax
import jax.numpy as jnp
from jax.experimental import pallas as pl
from jax.experimental.pallas import tpu as pltpu

SUBLANE = 8


def _round_up(x, m):
    return ((x + m - 1) // m) * m


def _mlp_kernel(x_ref, w1_ref, b1_ref, w2_ref, b2_ref, o_ref):
    # Cast the activation tile to bf16 in-registers (VPU slot is free here);
    # both matmuls accumulate in f32 on the MXU.
    x = x_ref[...].astype(jnp.bfloat16)                                   # [TB, D_in]
    h = jnp.dot(x, w1_ref[...], preferred_element_type=jnp.float32)       # [TB, H] f32
    h = jnp.maximum(h + b1_ref[...], 0.0)                                 # bias + ReLU in f32
    # dropout (eval mode) = identity
    out = jnp.dot(h.astype(jnp.bfloat16), w2_ref[...],
                  preferred_element_type=jnp.float32)                     # [TB, C] f32
    o_ref[...] = (out + b2_ref[...]).astype(o_ref.dtype)


def prepare_topic_classifier_params(w1, b1, w2, b2):
    """One-time weight prep (hoisted out of the per-call path).

    Takes PyTorch-layout weights (w: [out, in], b: [out]) and returns
    kernel-ready arrays: [in, out] bf16 weights and (1, out) f32 biases.
    """
    return dict(
        w1=jnp.asarray(w1).T.astype(jnp.bfloat16),                  # [D_in, H]
        b1=jnp.asarray(b1).reshape(1, -1).astype(jnp.float32),      # [1, H]
        w2=jnp.asarray(w2).T.astype(jnp.bfloat16),                  # [H, C]
        b2=jnp.asarray(b2).reshape(1, -1).astype(jnp.float32),      # [1, C]
    )


def topic_classifier_forward(x, params, *, block_b=512):
    """x: [B, D_in] (f32 or bf16); params from prepare_topic_classifier_params."""
    w1, b1, w2, b2 = params["w1"], params["b1"], params["w2"], params["b2"]
    B, D_in = x.shape
    H = w1.shape[1]
    C = w2.shape[1]
    assert w1.shape == (D_in, H) and b1.shape == (1, H)
    assert w2.shape == (H, C) and b2.shape == (1, C)

    # Batch tile: multiple of 8 sublanes, capped at block_b, and additionally
    # capped so the grid has >= 2 tiles when the batch allows it (v7x shards
    # the "parallel" batch axis across its two TensorCores).
    B_ru = _round_up(B, SUBLANE)
    two_tile_cap = max(SUBLANE, _round_up(pl.cdiv(B_ru, 2), SUBLANE))
    TB = min(block_b, two_tile_cap, B_ru)
    B_pad = _round_up(B, TB)

    # Only materialize a padded copy of x when the batch is not tile-aligned.
    x_in = x if B_pad == B else jnp.zeros((B_pad, D_in), x.dtype).at[:B].set(x)

    out_dtype = x.dtype
    grid = (B_pad // TB,)

    # Rough VMEM need: double-buffered x/out tiles + single-buffered weights.
    vmem_est = (
        2 * TB * D_in * jnp.dtype(x.dtype).itemsize
        + D_in * H * 2 + H * 4
        + H * C * 2 + C * 4
        + 2 * TB * C * jnp.dtype(out_dtype).itemsize
    )
    vmem_limit = int(min(64 << 20, max(16 << 20, 4 * vmem_est)))

    invariant = pl.Buffered(1)   # grid-invariant operands: no double buffering
    out = pl.pallas_call(
        _mlp_kernel,
        out_shape=jax.ShapeDtypeStruct((B_pad, C), out_dtype),
        grid=grid,
        in_specs=[
            pl.BlockSpec((TB, D_in), lambda i: (i, 0)),                       # x tile (pipelined)
            pl.BlockSpec((D_in, H), lambda i: (0, 0), pipeline_mode=invariant),  # w1 [D_in, H]
            pl.BlockSpec((1, H), lambda i: (0, 0), pipeline_mode=invariant),     # b1
            pl.BlockSpec((H, C), lambda i: (0, 0), pipeline_mode=invariant),     # w2 [H, C]
            pl.BlockSpec((1, C), lambda i: (0, 0), pipeline_mode=invariant),     # b2
        ],
        out_specs=pl.BlockSpec((TB, C), lambda i: (i, 0)),
        compiler_params=pltpu.CompilerParams(
            dimension_semantics=("parallel",),   # shard batch tiles across TCs
            vmem_limit_bytes=vmem_limit,
        ),
    )(x_in, w1, b1, w2, b2)

    return out if B_pad == B else out[:B]


def _init_linear(key, out_features, in_features):
    """Deterministic PyTorch-style Linear init: U(-1/sqrt(fan_in), 1/sqrt(fan_in))."""
    kw, kb = jax.random.split(key)
    bound = 1.0 / (in_features ** 0.5)
    w = jax.random.uniform(kw, (out_features, in_features), jnp.float32,
                           minval=-bound, maxval=bound)
    b = jax.random.uniform(kb, (out_features,), jnp.float32,
                           minval=-bound, maxval=bound)
    return w, b


if __name__ == "__main__":
    # Small shapes consistent with the module's forward: x is [batch, input_size].
    batch, input_size, hidden_size, num_classes = 8, 32, 32, 8

    root = jax.random.PRNGKey(0)
    kx, k1, k2 = jax.random.split(root, 3)

    x = jax.random.normal(kx, (batch, input_size), jnp.float32)
    w1, b1 = _init_linear(k1, hidden_size, input_size)
    w2, b2 = _init_linear(k2, num_classes, hidden_size)

    params = prepare_topic_classifier_params(w1, b1, w2, b2)   # one-time weight prep
    out = topic_classifier_forward(x, params)
    out = jax.block_until_ready(out)

    # Reference mirroring the kernel's bf16-input / f32-accumulate math.
    x_b = x.astype(jnp.bfloat16).astype(jnp.float32)
    w1_b = w1.astype(jnp.bfloat16).astype(jnp.float32)
    w2_b = w2.astype(jnp.bfloat16).astype(jnp.float32)
    h_ref = jnp.maximum(x_b @ w1_b.T + b1, 0.0)
    h_ref = h_ref.astype(jnp.bfloat16).astype(jnp.float32)
    ref_bf16 = h_ref @ w2_b.T + b2
    # Full-precision reference for a sanity bound.
    ref_f32 = jnp.maximum(x @ w1.T + b1, 0.0) @ w2.T + b2

    assert out.shape == (batch, num_classes)
    assert out.dtype == x.dtype
    assert jnp.allclose(out, ref_bf16, atol=1e-3, rtol=1e-3)
    assert jnp.allclose(out, ref_f32, atol=5e-2, rtol=5e-2)

    print("KERNEL_OK")
</pallas_src>

<mosaic_0001>
module attributes {stable_mosaic.version = 11 : i64} {
  func.func @_mlp_kernel(%arg0: i32, %arg1: memref<8x32xf32, #tpu.memory_space<vmem>>, %arg2: memref<32x32xbf16, #tpu.memory_space<vmem>>, %arg3: memref<1x32xf32, #tpu.memory_space<vmem>>, %arg4: memref<32x8xbf16, #tpu.memory_space<vmem>>, %arg5: memref<1x8xf32, #tpu.memory_space<vmem>>, %arg6: memref<8x8xf32, #tpu.memory_space<vmem>>) attributes {dimension_semantics = [#tpu.dimension_semantics<parallel>], iteration_bounds = array<i64: 1>, scalar_prefetch = 0 : i64, scratch_operands = 0 : i64, tpu.core_type = #tpu.core_type<tc>, window_params = [{transform_indices = @transform_0, window_bounds = array<i64: 8, 32>}, {pipeline_mode = #tpu.pipeline_mode<synchronous>, transform_indices = @transform_1, window_bounds = array<i64: 32, 32>}, {pipeline_mode = #tpu.pipeline_mode<synchronous>, transform_indices = @transform_2, window_bounds = array<i64: 1, 32>}, {pipeline_mode = #tpu.pipeline_mode<synchronous>, transform_indices = @transform_3, window_bounds = array<i64: 32, 8>}, {pipeline_mode = #tpu.pipeline_mode<synchronous>, transform_indices = @transform_4, window_bounds = array<i64: 1, 8>}, {transform_indices = @transform_5, window_bounds = array<i64: 8, 8>}]} {
    %c0 = arith.constant 0 : index
    %c0_0 = arith.constant 0 : index
    %0 = vector.load %arg1[%c0, %c0_0] : memref<8x32xf32, #tpu.memory_space<vmem>>, vector<8x32xf32>
    %1 = arith.truncf %0 : vector<8x32xf32> to vector<8x32xbf16>
    %c0_1 = arith.constant 0 : index
    %c0_2 = arith.constant 0 : index
    %2 = vector.load %arg2[%c0_1, %c0_2] : memref<32x32xbf16, #tpu.memory_space<vmem>>, vector<32x32xbf16>
    %cst = arith.constant dense<0.000000e+00> : vector<8x32xf32>
    %3 = tpu.matmul %1, %2, %cst {dimension_numbers = #tpu.dot_dimension_numbers<[1], [0], [0], [1], [0, 0, 1, 1], [], []>} : vector<8x32xbf16>, vector<32x32xbf16>, vector<8x32xf32> -> vector<8x32xf32>
    %c0_3 = arith.constant 0 : index
    %c0_4 = arith.constant 0 : index
    %4 = vector.load %arg3[%c0_3, %c0_4] : memref<1x32xf32, #tpu.memory_space<vmem>>, vector<1x32xf32>
    %5 = vector.broadcast %4 : vector<1x32xf32> to vector<8x32xf32>
    %6 = arith.addf %3, %5 : vector<8x32xf32>
    %cst_5 = arith.constant 0.000000e+00 : f32
    %7 = vector.broadcast %cst_5 : f32 to vector<8x32xf32>
    %8 = arith.maximumf %6, %7 : vector<8x32xf32>
    %9 = arith.truncf %8 : vector<8x32xf32> to vector<8x32xbf16>
    %c0_6 = arith.constant 0 : index
    %c0_7 = arith.constant 0 : index
    %10 = vector.load %arg4[%c0_6, %c0_7] : memref<32x8xbf16, #tpu.memory_space<vmem>>, vector<32x8xbf16>
    %cst_8 = arith.constant dense<0.000000e+00> : vector<8x8xf32>
    %11 = tpu.matmul %9, %10, %cst_8 {dimension_numbers = #tpu.dot_dimension_numbers<[1], [0], [0], [1], [0, 0, 1, 1], [], []>} : vector<8x32xbf16>, vector<32x8xbf16>, vector<8x8xf32> -> vector<8x8xf32>
    %c0_9 = arith.constant 0 : index
    %c0_10 = arith.constant 0 : index
    %12 = vector.load %arg5[%c0_9, %c0_10] : memref<1x8xf32, #tpu.memory_space<vmem>>, vector<1x8xf32>
    %13 = vector.broadcast %12 : vector<1x8xf32> to vector<8x8xf32>
    %14 = arith.addf %11, %13 : vector<8x8xf32>
    %c0_11 = arith.constant 0 : index
    %c0_12 = arith.constant 0 : index
    %15 = vector.load %arg6[%c0_11, %c0_12] : memref<8x8xf32, #tpu.memory_space<vmem>>, vector<8x8xf32>
    tpu.vector_store %arg6[%c0_11, %c0_12], %14 {strides = array<i32>} : memref<8x8xf32, #tpu.memory_space<vmem>>, vector<8x8xf32>,
    return
  }
  func.func @transform_0(%arg0: i32) -> (i32, i32) {
    %c0_i32 = arith.constant 0 : i32
    %c0_i32_0 = arith.constant 0 : i32
    return %arg0, %c0_i32 : i32, i32
  }
  func.func @transform_1(%arg0: i32) -> (i32, i32) {
    %c0_i32 = arith.constant 0 : i32
    %c0_i32_0 = arith.constant 0 : i32
    %c0_i32_1 = arith.constant 0 : i32
    return %c0_i32, %c0_i32_0 : i32, i32
  }
  func.func @transform_2(%arg0: i32) -> (i32, i32) {
    %c0_i32 = arith.constant 0 : i32
    %c0_i32_0 = arith.constant 0 : i32
    %c0_i32_1 = arith.constant 0 : i32
    return %c0_i32, %c0_i32_0 : i32, i32
  }
  func.func @transform_3(%arg0: i32) -> (i32, i32) {
    %c0_i32 = arith.constant 0 : i32
    %c0_i32_0 = arith.constant 0 : i32
    %c0_i32_1 = arith.constant 0 : i32
    return %c0_i32, %c0_i32_0 : i32, i32
  }
  func.func @transform_4(%arg0: i32) -> (i32, i32) {
    %c0_i32 = arith.constant 0 : i32
    %c0_i32_0 = arith.constant 0 : i32
    %c0_i32_1 = arith.constant 0 : i32
    return %c0_i32, %c0_i32_0 : i32, i32
  }
  func.func @transform_5(%arg0: i32) -> (i32, i32) {
    %c0_i32 = arith.constant 0 : i32
    %c0_i32_0 = arith.constant 0 : i32
    return %arg0, %c0_i32 : i32, i32
  }
}

</mosaic_0001>

<llo_original>
// kernel: tpu_custom_call.1
$region0: #{tpu_custom_call.1}
  #allocation0 [shape = 'u32[]', space=smem, size = 0x4, offset = 0x4, fixed_abs, tag = 'smem constant byte address 0x4 - core index']
  #allocation1 [shape = 'u32[144,128]{1,0:T(1,128)}', space=vmem, size = 0x12000, scoped, tag = 'internal scratch']
  %s0 = inlined_call_operand.hbm [shape: f32[8,32], index: 0, kind: input, shape index: {}]
  %s1 = inlined_call_operand.vmem [shape: bf16[32,32], index: 1, kind: input, shape index: {}]
  %s2 = inlined_call_operand.vmem [shape: f32[1,32], index: 2, kind: input, shape index: {}]
  %s3 = inlined_call_operand.vmem [shape: bf16[32,8], index: 3, kind: input, shape index: {}]
  %s4 = inlined_call_operand.vmem [shape: f32[1,8], index: 4, kind: input, shape index: {}]
  %s5 = inlined_call_operand.hbm [shape: f32[8,8], index: 5, kind: output, shape index: {}]
  %s6 = sld [smem:[#allocation0]]
  $region34: #{tpu_custom_call.1} parent=0
    _
  %s8 = ssub.s32 1, %s6
  %s9 = scalar_select 0, %s8, %s6
  $region1: #{tpu_custom_call.1} parent=0
    #allocation2 [shape = 'u8[4096]{0}', space=vmem, size = 0x1000, scoped, tag = 'input window, operand 0, single buffered']
    #allocation3 [shape = 's32[1]{0}', space=sflag, size = 0x4, scoped, tag = 'scoped memory for tpu_custom_call.1']
    #allocation4 [shape = 's32[1]{0}', space=sflag, size = 0x4, scoped, tag = 'scoped memory for tpu_custom_call.1']
    #allocation5 [shape = 'u8[4096]{0}', space=vmem, size = 0x1000, scoped, tag = 'output window, operand 0, single buffered']
    %10 = vsyncpa [#allocation3], 0
    %11 = vsyncpa [#allocation4], 0
    // Predicated region
    $region2: #{tpu_custom_call.1} parent=1 // pred_check
      _
    $region3: #{tpu_custom_call.1} parent=1 // pred_check_branch
      %13 = sbr.rel (0) target = $region5
    $region4: #{tpu_custom_call.1} parent=1 // pred_region
      %s15 = ssub.s32 128, 128
      %16 = vsyncadd [#allocation3], %s15
      %s18 = sshll.u32 [#allocation2], 4
      %s19 = int_to_ptr.vmem [resolvable:$true] %s18
      %21 = dma.hbm_to_vmem [thread:$0]  %s0, 128, %s19, [#allocation3]
    $region5: #{tpu_custom_call.1} parent=1 // pred_fallthru
      _
    // Predicated region
    $region6: #{tpu_custom_call.1} parent=1 // pred_check
      _
    $region7: #{tpu_custom_call.1} parent=1 // pred_check_branch
      %23 = sbr.rel (0) target = $region9
    $region8: #{tpu_custom_call.1} parent=1 // pred_region
      _
    $region9: #{tpu_custom_call.1} parent=1 // pred_fallthru
      _
    // Predicated region
    $region10: #{tpu_custom_call.1} parent=1 // pred_check
      _
    $region11: #{tpu_custom_call.1} parent=1 // pred_check_branch
      %25 = sbr.rel (0) target = $region13
    $region12: #{tpu_custom_call.1} parent=1 // pred_region
      _
    $region13: #{tpu_custom_call.1} parent=1 // pred_fallthru
      _
    // Predicated region
    $region14: #{tpu_custom_call.1} parent=1 // pred_check
      _
    $region15: #{tpu_custom_call.1} parent=1 // pred_check_branch
      %27 = sbr.rel (0) target = $region17
    $region16: #{tpu_custom_call.1} parent=1 // pred_region
      _
    $region17: #{tpu_custom_call.1} parent=1 // pred_fallthru
      _
    // Predicated region
    $region18: #{tpu_custom_call.1} parent=1 // pred_check
      _
    $region19: #{tpu_custom_call.1} parent=1 // pred_check_branch
      %29 = sbr.rel (0) target = $region21
    $region20: #{tpu_custom_call.1} parent=1 // pred_region
      _
    $region21: #{tpu_custom_call.1} parent=1 // pred_fallthru
      _
    // Predicated region
    $region22: #{tpu_custom_call.1} parent=1 // pred_check
      _
    $region23: #{tpu_custom_call.1} parent=1 // pred_check_branch
      %31 = sbr.rel (0) target = $region25
    $region24: #{tpu_custom_call.1} parent=1 // pred_region
      %32 = dma.done [#allocation3], 128
    $region25: #{tpu_custom_call.1} parent=1 // pred_fallthru
      _
    %v34 = vld [vmem:[#allocation2] sm:$0xff]
    %v35 = vpack.c.bf16 %v34, %v34
    %v36 = vld [vmem:[%s1] sm:$0xf]
    %v37 = vld [vmem:[%s1 + $0x4] sm:$0xf]
    %v38 = vld [vmem:[%s1 + $0x8] sm:$0xf]
    %v39 = vld [vmem:[%s1 + $0xc] sm:$0xf]
    %v40 = vld [vmem:[%s2] sm:$0x1]
    %v42 = vlaneseq
    %v43 = vshrl.u32 %v42, 7
    %v44 = vsub.s32 0, %v43
    %v45 = vrot.slane %v40, %v44
    %v51 = vunpack.c.l.b16 %v36
    %v52 = vunpack.c.l.b16 %v37
    %v53 = vunpack.c.l.b16 %v38
    %v54 = vunpack.c.l.b16 %v39
    %v55 = vpack.c.b16 %v52, %v51
    %v56 = vpack.c.b16 %v54, %v53
    %vm59 = vcmask 261120
    %v61 = vsel %vm59, %v35, 0
    %63 = vmatprep.subr.bf16.mxu0 0
    %64 = vmatpush1.bf16.msra.mxu0 0
    %65 = vmatprep.subr.bf16.mxu0 0
    %66 = vmatpush1.bf16.msra.mxu0 0
    %67 = vmatprep.subr.bf16.mxu0 0
    %68 = vmatpush1.bf16.msra.mxu0 0
    %69 = vmatprep.subr.bf16.mxu0 0
    %70 = vmatpush1.bf16.msra.mxu0 0
    %71 = vmatprep.subr.bf16.mxu0 0
    %72 = vmatpush1.bf16.msra.mxu0 0
    %73 = vmatprep.subr.bf16.mxu0 0
    %74 = vmatpush1.bf16.msra.mxu0 0
    %75 = vmatprep.subr.bf16.mxu0 0
    %76 = vmatpush1.bf16.msra.mxu0 %v56
    %77 = vmatprep.subr.bf16.mxu0 0
    %78 = vmatpush1.bf16.msra.mxu0 %v55
    %79 = vmatprep.subr.bf16.mxu0 0
    %80 = vmatpush2.bf16.msra.mxu0 0
    %81 = vmatprep.subr.bf16.mxu0 0
    %82 = vmatpush2.bf16.msra.mxu0 0
    %83 = vmatprep.subr.bf16.mxu0 0
    %84 = vmatpush2.bf16.msra.mxu0 0
    %85 = vmatprep.subr.bf16.mxu0 0
    %86 = vmatpush2.bf16.msra.mxu0 0
    %87 = vmatprep.subr.bf16.mxu0 0
    %88 = vmatpush2.bf16.msra.mxu0 0
    %89 = vmatprep.subr.bf16.mxu0 0
    %90 = vmatpush2.bf16.msra.mxu0 0
    %91 = vmatprep.subr.bf16.mxu0 0
    %92 = vmatpush2.bf16.msra.mxu0 0
    %93 = vmatprep.subr.bf16.mxu0 0
    %94 = vmatpush2.bf16.msra.mxu0 0
    %95 = vmatprep.mubr.bf16.mxu0 0
    %96 = vmatmul.mubr.bf16.gmra.mxu0 %v61
    %v97 = vpop.f32.mrf.mxu0
    %v98 = vadd.f32 %v45, %v97
    %v99 = vpop.f32.mrf.mxu0
    %v100 = vpop.f32.mrf.mxu0
    %v101 = vpop.f32.mrf.mxu0
    %102 = vdwg.mxu0
    %v103 = vmax.f32 %v98, 0.0
    %v104 = vpack.c.bf16 %v103, %v103
    %v105 = vld [vmem:[%s3] sm:$0xf]
    %v106 = vld [vmem:[%s3 + $0x4] sm:$0xf]
    %v107 = vld [vmem:[%s3 + $0x8] sm:$0xf]
    %v108 = vld [vmem:[%s3 + $0xc] sm:$0xf]
    %v109 = vld [vmem:[%s4] sm:$0x1]
    %v111 = vlaneseq
    %v112 = vshrl.u32 %v111, 7
    %v113 = vsub.s32 0, %v112
    %v114 = vrot.slane %v109, %v113
    %v120 = vunpack.c.l.b16 %v105
    %v121 = vunpack.c.l.b16 %v106
    %v122 = vunpack.c.l.b16 %v107
    %v123 = vunpack.c.l.b16 %v108
    %v124 = vpack.c.b16 %v121, %v120
    %v125 = vpack.c.b16 %v123, %v122
    %v129 = vsel %vm59, %v104, 0
    %131 = vmatprep.subr.bf16.mxu0 0
    %132 = vmatpush1.bf16.msra.mxu0 0
    %133 = vmatprep.subr.bf16.mxu0 0
    %134 = vmatpush1.bf16.msra.mxu0 0
    %135 = vmatprep.subr.bf16.mxu0 0
    %136 = vmatpush1.bf16.msra.mxu0 0
    %137 = vmatprep.subr.bf16.mxu0 0
    %138 = vmatpush1.bf16.msra.mxu0 0
    %139 = vmatprep.subr.bf16.mxu0 0
    %140 = vmatpush1.bf16.msra.mxu0 0
    %141 = vmatprep.subr.bf16.mxu0 0
    %142 = vmatpush1.bf16.msra.mxu0 0
    %143 = vmatprep.subr.bf16.mxu0 0
    %144 = vmatpush1.bf16.msra.mxu0 %v125
    %145 = vmatprep.subr.bf16.mxu0 0
    %146 = vmatpush1.bf16.msra.mxu0 %v124
    %147 = vmatprep.subr.bf16.mxu0 0
    %148 = vmatpush2.bf16.msra.mxu0 0
    %149 = vmatprep.subr.bf16.mxu0 0
    %150 = vmatpush2.bf16.msra.mxu0 0
    %151 = vmatprep.subr.bf16.mxu0 0
    %152 = vmatpush2.bf16.msra.mxu0 0
    %153 = vmatprep.subr.bf16.mxu0 0
    %154 = vmatpush2.bf16.msra.mxu0 0
    %155 = vmatprep.subr.bf16.mxu0 0
    %156 = vmatpush2.bf16.msra.mxu0 0
    %157 = vmatprep.subr.bf16.mxu0 0
    %158 = vmatpush2.bf16.msra.mxu0 0
    %159 = vmatprep.subr.bf16.mxu0 0
    %160 = vmatpush2.bf16.msra.mxu0 0
    %161 = vmatprep.subr.bf16.mxu0 0
    %162 = vmatpush2.bf16.msra.mxu0 0
    %163 = vmatprep.mubr.bf16.mxu0 0
    %164 = vmatmul.mubr.bf16.gmra.mxu0 %v129
    %v165 = vpop.f32.mrf.mxu0
    %v166 = vadd.f32 %v114, %v165
    %v167 = vpop.f32.mrf.mxu0
    %v168 = vpop.f32.mrf.mxu0
    %v169 = vpop.f32.mrf.mxu0
    %170 = vdwg.mxu0
    %vm171 = vcmask 64512
    %172 = vst.msk [vmem:[#allocation5] sm:$0xff] %vm171, %v166
    // Predicated region
    $region26: #{tpu_custom_call.1} parent=1 // pred_check
      _
    $region27: #{tpu_custom_call.1} parent=1 // pred_check_branch
      %174 = sbr.rel (0) target = $region29
    $region28: #{tpu_custom_call.1} parent=1 // pred_region
      %s176 = ssub.s32 128, 128
      %177 = vsyncadd [#allocation4], %s176
      %s179 = sshll.u32 [#allocation5], 4
      %s180 = int_to_ptr.vmem [resolvable:$true] %s179
      %182 = dma.vmem_to_hbm [thread:$0]  %s180, 128, %s5, [#allocation4]
    $region29: #{tpu_custom_call.1} parent=1 // pred_fallthru
      _
    // Predicated region
    $region30: #{tpu_custom_call.1} parent=1 // pred_check
      _
    $region31: #{tpu_custom_call.1} parent=1 // pred_check_branch
      %184 = sbr.rel (0) target = $region33
    $region32: #{tpu_custom_call.1} parent=1 // pred_region
      %185 = dma.done [#allocation4], 128
    $region33: #{tpu_custom_call.1} parent=1 // pred_fallthru
      _
    %186 = vsyncpa [#allocation3], 1
    %187 = vsyncpa [#allocation4], 1

</llo_original>
